<compile_context>
chip_gen: v6e
topology: v6e:2x2x1
jax: 0.10.0
libtpu: 0.0.40
codegen_flags: <defaults>
</compile_context>

<pallas_src>
import functools

import jax
import jax.numpy as jnp
from jax.experimental import pallas as pl
from jax.experimental.pallas import tpu as pltpu


def policy_kernel(x_ref, w1_ref, b1_ref, w2_ref, b2_ref, out_ref):
    x = x_ref[...]          # [S, Bb]  (batch on the lane axis)
    w1 = w1_ref[...]        # [H, S]
    s = w1.shape[1]

    # --- fc1 + ReLU: K=4 contraction as unrolled VPU broadcast FMAs ---------
    h = b1_ref[...] + w1[:, 0:1] * x[0:1, :]          # [H, Bb]
    for k in range(1, s):
        h = h + w1[:, k:k + 1] * x[k:k + 1, :]
    h = jnp.maximum(h, 0.0)

    # --- fc2 on the MXU: [A, H] @ [H, Bb] -> [A, Bb] -------------------------
    logits = jnp.dot(w2_ref[...], h, preferred_element_type=jnp.float32)
    logits = logits + b2_ref[...]                      # broadcast [A, 1]

    # --- softmax over the action axis (axis 0 in this layout) ----------------
    a = out_ref.shape[0]
    if a == 2:
        # Two-row closed form: pure VPU/EUP work, numerically stable.
        l0 = logits[0:1, :]
        l1 = logits[1:2, :]
        m = jnp.maximum(l0, l1)
        e0 = jnp.exp(l0 - m)
        e1 = jnp.exp(l1 - m)
        inv = pl.reciprocal(e0 + e1, approx=False)     # exact: keeps 1e-5 tol
        out_ref[...] = jnp.concatenate([e0 * inv, e1 * inv], axis=0)
    else:
        m = jnp.max(logits, axis=0, keepdims=True)
        e = jnp.exp(logits - m)
        inv = pl.reciprocal(jnp.sum(e, axis=0, keepdims=True), approx=False)
        out_ref[...] = e * inv


def _round_up(n, m):
    return ((n + m - 1) // m) * m


@functools.partial(jax.jit, static_argnames=("max_block_b",))
def policy_forward(x, w1, b1, w2, b2, *, max_block_b=512):
    """Policy forward pass.

    x : [B, state]        (PyTorch layout)
    w1: [hidden, state]   b1: [hidden]
    w2: [action, hidden]  b2: [action]
    returns probs [B, action].
    """
    B, S = x.shape
    H = w1.shape[0]
    A = w2.shape[0]

    bb = min(max_block_b, _round_up(B, 128))   # lane-dense batch block
    Bp = _round_up(B, bb)

    x_t = jnp.transpose(x).astype(jnp.float32)          # [S, B], batch -> lanes
    if Bp != B:
        x_t = jnp.pad(x_t, ((0, 0), (0, Bp - B)))       # zero-pad batch

    full = lambda i: (0, 0)                              # weights resident in VMEM
    probs_t = pl.pallas_call(
        policy_kernel,
        out_shape=jax.ShapeDtypeStruct((A, Bp), jnp.float32),
        grid=(Bp // bb,),
        in_specs=[
            pl.BlockSpec((S, bb), lambda i: (0, i)),     # x (advances along B)
            pl.BlockSpec((H, S), full),                  # w1
            pl.BlockSpec((H, 1), full),                  # b1
            pl.BlockSpec((A, H), full),                  # w2
            pl.BlockSpec((A, 1), full),                  # b2
        ],
        out_specs=pl.BlockSpec((A, bb), lambda i: (0, i)),
        compiler_params=pltpu.CompilerParams(
            dimension_semantics=("parallel",)),
    )(x_t, w1, b1.reshape(H, 1), w2, b2.reshape(A, 1))

    return jnp.transpose(probs_t[:, :B])                 # [B, A]


def init_policy_params(key, state_size=4, action_size=2, hidden_size=32):
    """PyTorch-default-like Linear init; weights kept in PyTorch [out, in] layout."""
    k1, k2, k3, k4 = jax.random.split(key, 4)
    bound1 = 1.0 / jnp.sqrt(jnp.float32(state_size))
    bound2 = 1.0 / jnp.sqrt(jnp.float32(hidden_size))
    w1 = jax.random.uniform(k1, (hidden_size, state_size), jnp.float32,
                            minval=-bound1, maxval=bound1)
    b1 = jax.random.uniform(k2, (hidden_size,), jnp.float32,
                            minval=-bound1, maxval=bound1)
    w2 = jax.random.uniform(k3, (action_size, hidden_size), jnp.float32,
                            minval=-bound2, maxval=bound2)
    b2 = jax.random.uniform(k4, (action_size,), jnp.float32,
                            minval=-bound2, maxval=bound2)
    return w1, b1, w2, b2


def policy_reference(x, w1, b1, w2, b2):
    h = jnp.maximum(x @ w1.T + b1[None, :], 0.0)
    return jax.nn.softmax(h @ w2.T + b2[None, :], axis=1)


if __name__ == "__main__":
    key = jax.random.PRNGKey(0)
    k_params, k_x1, k_x2 = jax.random.split(key, 3)

    state_size, action_size, hidden_size = 4, 2, 32
    w1, b1, w2, b2 = init_policy_params(
        k_params, state_size, action_size, hidden_size)

    # Small demo batch (matches the RL module's typical tiny-batch use).
    x_small = jax.random.normal(k_x1, (2, state_size), jnp.float32)
    probs_small = jax.block_until_ready(policy_forward(x_small, w1, b1, w2, b2))
    ref_small = policy_reference(x_small, w1, b1, w2, b2)
    assert probs_small.shape == (2, action_size)
    assert jnp.allclose(probs_small, ref_small, atol=1e-5, rtol=1e-5)
    assert jnp.allclose(jnp.sum(probs_small, axis=1), 1.0, atol=1e-5)

    # Larger vectorized-env batch: exercises the batch grid (2 blocks of 512)
    # and the padding path (1000 -> 1024 columns).
    x_big = jax.random.normal(k_x2, (1000, state_size), jnp.float32)
    probs_big = jax.block_until_ready(policy_forward(x_big, w1, b1, w2, b2))
    ref_big = policy_reference(x_big, w1, b1, w2, b2)
    assert probs_big.shape == (1000, action_size)
    assert jnp.allclose(probs_big, ref_big, atol=1e-5, rtol=1e-5)
    assert jnp.allclose(jnp.sum(probs_big, axis=1), 1.0, atol=1e-5)

    # TODO(synk): `act()` (Categorical sampling / log_prob) is host-side RL
    # glue, not part of the tensor forward pass, so it is not implemented
    # in-kernel.
    print("KERNEL_OK")
</pallas_src>

<mosaic_0001>
module attributes {stable_mosaic.version = 11 : i64} {
  func.func @policy_kernel(%arg0: i32, %arg1: memref<4x128xf32, #tpu.memory_space<vmem>>, %arg2: memref<32x4xf32, #tpu.memory_space<vmem>>, %arg3: memref<32x1xf32, #tpu.memory_space<vmem>>, %arg4: memref<2x32xf32, #tpu.memory_space<vmem>>, %arg5: memref<2x1xf32, #tpu.memory_space<vmem>>, %arg6: memref<2x128xf32, #tpu.memory_space<vmem>>) attributes {dimension_semantics = [#tpu.dimension_semantics<parallel>], iteration_bounds = array<i64: 1>, scalar_prefetch = 0 : i64, scratch_operands = 0 : i64, tpu.core_type = #tpu.core_type<tc>, window_params = [{transform_indices = @transform_0, window_bounds = array<i64: 4, 128>}, {pipeline_mode = #tpu.pipeline_mode<synchronous>, transform_indices = @transform_1, window_bounds = array<i64: 32, 4>}, {pipeline_mode = #tpu.pipeline_mode<synchronous>, transform_indices = @transform_2, window_bounds = array<i64: 32, 1>}, {pipeline_mode = #tpu.pipeline_mode<synchronous>, transform_indices = @transform_3, window_bounds = array<i64: 2, 32>}, {pipeline_mode = #tpu.pipeline_mode<synchronous>, transform_indices = @transform_4, window_bounds = array<i64: 2, 1>}, {transform_indices = @transform_5, window_bounds = array<i64: 2, 128>}]} {
    %c0 = arith.constant 0 : index
    %c0_0 = arith.constant 0 : index
    %0 = vector.load %arg1[%c0, %c0_0] : memref<4x128xf32, #tpu.memory_space<vmem>>, vector<4x128xf32>
    %c0_1 = arith.constant 0 : index
    %c0_2 = arith.constant 0 : index
    %1 = vector.load %arg2[%c0_1, %c0_2] : memref<32x4xf32, #tpu.memory_space<vmem>>, vector<32x4xf32>
    %c0_3 = arith.constant 0 : index
    %c0_4 = arith.constant 0 : index
    %2 = vector.load %arg3[%c0_3, %c0_4] : memref<32x1xf32, #tpu.memory_space<vmem>>, vector<32x1xf32>
    %3 = vector.extract_strided_slice %1 {offsets = [0, 0], sizes = [32, 1], strides = [1, 1]} : vector<32x4xf32> to vector<32x1xf32>
    %4 = vector.extract_strided_slice %0 {offsets = [0, 0], sizes = [1, 128], strides = [1, 1]} : vector<4x128xf32> to vector<1x128xf32>
    %5 = vector.broadcast %3 : vector<32x1xf32> to vector<32x128xf32>
    %6 = vector.broadcast %4 : vector<1x128xf32> to vector<32x128xf32>
    %7 = arith.mulf %5, %6 : vector<32x128xf32>
    %8 = vector.broadcast %2 : vector<32x1xf32> to vector<32x128xf32>
    %9 = arith.addf %8, %7 : vector<32x128xf32>
    %10 = vector.extract_strided_slice %1 {offsets = [0, 1], sizes = [32, 1], strides = [1, 1]} : vector<32x4xf32> to vector<32x1xf32>
    %11 = vector.extract_strided_slice %0 {offsets = [1, 0], sizes = [1, 128], strides = [1, 1]} : vector<4x128xf32> to vector<1x128xf32>
    %12 = vector.broadcast %10 : vector<32x1xf32> to vector<32x128xf32>
    %13 = vector.broadcast %11 : vector<1x128xf32> to vector<32x128xf32>
    %14 = arith.mulf %12, %13 : vector<32x128xf32>
    %15 = arith.addf %9, %14 : vector<32x128xf32>
    %16 = vector.extract_strided_slice %1 {offsets = [0, 2], sizes = [32, 1], strides = [1, 1]} : vector<32x4xf32> to vector<32x1xf32>
    %17 = vector.extract_strided_slice %0 {offsets = [2, 0], sizes = [1, 128], strides = [1, 1]} : vector<4x128xf32> to vector<1x128xf32>
    %18 = vector.broadcast %16 : vector<32x1xf32> to vector<32x128xf32>
    %19 = vector.broadcast %17 : vector<1x128xf32> to vector<32x128xf32>
    %20 = arith.mulf %18, %19 : vector<32x128xf32>
    %21 = arith.addf %15, %20 : vector<32x128xf32>
    %22 = vector.extract_strided_slice %1 {offsets = [0, 3], sizes = [32, 1], strides = [1, 1]} : vector<32x4xf32> to vector<32x1xf32>
    %23 = vector.extract_strided_slice %0 {offsets = [3, 0], sizes = [1, 128], strides = [1, 1]} : vector<4x128xf32> to vector<1x128xf32>
    %24 = vector.broadcast %22 : vector<32x1xf32> to vector<32x128xf32>
    %25 = vector.broadcast %23 : vector<1x128xf32> to vector<32x128xf32>
    %26 = arith.mulf %24, %25 : vector<32x128xf32>
    %27 = arith.addf %21, %26 : vector<32x128xf32>
    %cst = arith.constant 0.000000e+00 : f32
    %28 = vector.broadcast %cst : f32 to vector<32x128xf32>
    %29 = arith.maximumf %27, %28 : vector<32x128xf32>
    %c0_5 = arith.constant 0 : index
    %c0_6 = arith.constant 0 : index
    %30 = vector.load %arg4[%c0_5, %c0_6] : memref<2x32xf32, #tpu.memory_space<vmem>>, vector<2x32xf32>
    %cst_7 = arith.constant dense<0.000000e+00> : vector<2x128xf32>
    %31 = tpu.matmul %30, %29, %cst_7 {dimension_numbers = #tpu.dot_dimension_numbers<[1], [0], [0], [1], [0, 0, 1, 1], [], []>} : vector<2x32xf32>, vector<32x128xf32>, vector<2x128xf32> -> vector<2x128xf32>
    %c0_8 = arith.constant 0 : index
    %c0_9 = arith.constant 0 : index
    %32 = vector.load %arg5[%c0_8, %c0_9] : memref<2x1xf32, #tpu.memory_space<vmem>>, vector<2x1xf32>
    %33 = vector.broadcast %32 : vector<2x1xf32> to vector<2x128xf32>
    %34 = arith.addf %31, %33 : vector<2x128xf32>
    %35 = vector.extract_strided_slice %34 {offsets = [0, 0], sizes = [1, 128], strides = [1, 1]} : vector<2x128xf32> to vector<1x128xf32>
    %36 = vector.extract_strided_slice %34 {offsets = [1, 0], sizes = [1, 128], strides = [1, 1]} : vector<2x128xf32> to vector<1x128xf32>
    %37 = arith.maximumf %35, %36 : vector<1x128xf32>
    %38 = arith.subf %35, %37 : vector<1x128xf32>
    %39 = math.exp %38 : vector<1x128xf32>
    %40 = arith.subf %36, %37 : vector<1x128xf32>
    %41 = math.exp %40 : vector<1x128xf32>
    %42 = arith.addf %39, %41 : vector<1x128xf32>
    %43 = tpu.reciprocal %42 : vector<1x128xf32> -> vector<1x128xf32>
    %44 = arith.mulf %39, %43 : vector<1x128xf32>
    %45 = arith.mulf %41, %43 : vector<1x128xf32>
    %46 = tpu.concatenate %44, %45 in 0 : vector<1x128xf32>, vector<1x128xf32> -> vector<2x128xf32>
    %c0_10 = arith.constant 0 : index
    %c0_11 = arith.constant 0 : index
    %47 = vector.load %arg6[%c0_10, %c0_11] : memref<2x128xf32, #tpu.memory_space<vmem>>, vector<2x128xf32>
    tpu.vector_store %arg6[%c0_10, %c0_11], %46 {strides = array<i32>} : memref<2x128xf32, #tpu.memory_space<vmem>>, vector<2x128xf32>,
    return
  }
  func.func @transform_0(%arg0: i32) -> (i32, i32) {
    %c0_i32 = arith.constant 0 : i32
    %c0_i32_0 = arith.constant 0 : i32
    return %c0_i32, %arg0 : i32, i32
  }
  func.func @transform_1(%arg0: i32) -> (i32, i32) {
    %c0_i32 = arith.constant 0 : i32
    %c0_i32_0 = arith.constant 0 : i32
    %c0_i32_1 = arith.constant 0 : i32
    return %c0_i32, %c0_i32_0 : i32, i32
  }
  func.func @transform_2(%arg0: i32) -> (i32, i32) {
    %c0_i32 = arith.constant 0 : i32
    %c0_i32_0 = arith.constant 0 : i32
    %c0_i32_1 = arith.constant 0 : i32
    return %c0_i32, %c0_i32_0 : i32, i32
  }
  func.func @transform_3(%arg0: i32) -> (i32, i32) {
    %c0_i32 = arith.constant 0 : i32
    %c0_i32_0 = arith.constant 0 : i32
    %c0_i32_1 = arith.constant 0 : i32
    return %c0_i32, %c0_i32_0 : i32, i32
  }
  func.func @transform_4(%arg0: i32) -> (i32, i32) {
    %c0_i32 = arith.constant 0 : i32
    %c0_i32_0 = arith.constant 0 : i32
    %c0_i32_1 = arith.constant 0 : i32
    return %c0_i32, %c0_i32_0 : i32, i32
  }
  func.func @transform_5(%arg0: i32) -> (i32, i32) {
    %c0_i32 = arith.constant 0 : i32
    %c0_i32_0 = arith.constant 0 : i32
    return %c0_i32, %arg0 : i32, i32
  }
}

</mosaic_0001>

<llo_original>
// kernel: policy_forward.1
$region0: #{policy_forward.1}
  #allocation0 [shape = 'u32[]', space=smem, size = 0x4, offset = 0x4, fixed_abs, tag = 'smem constant byte address 0x4 - core index']
  #allocation1 [shape = 'u32[144,128]{1,0:T(1,128)}', space=vmem, size = 0x12000, scoped, tag = 'internal scratch']
  %s0 = inlined_call_operand.vmem [shape: f32[4,128], index: 0, kind: input, shape index: {}]
  %s1 = inlined_call_operand.vmem [shape: f32[32,4], index: 1, kind: input, shape index: {}]
  %s2 = inlined_call_operand.vmem [shape: f32[32,1], index: 2, kind: input, shape index: {}]
  %s3 = inlined_call_operand.vmem [shape: f32[2,32], index: 3, kind: input, shape index: {}]
  %s4 = inlined_call_operand.vmem [shape: f32[2,1], index: 4, kind: input, shape index: {}]
  %s5 = inlined_call_operand.vmem [shape: f32[2,128], index: 5, kind: output, shape index: {}]
  %s6 = sld [smem:[#allocation0]]
  $region30: #{policy_forward.1} parent=0
    _
  %s8 = ssub.s32 1, %s6
  %s9 = scalar_select 0, %s8, %s6
  // Predicated region
  $region2: #{policy_forward.1} parent=0 // pred_check
    _
  $region3: #{policy_forward.1} parent=0 // pred_check_branch
    %11 = sbr.rel (0) target = $region5
  $region4: #{policy_forward.1} parent=0 // pred_region
    _
  $region5: #{policy_forward.1} parent=0 // pred_fallthru
    _
  // Predicated region
  $region6: #{policy_forward.1} parent=0 // pred_check
    _
  $region7: #{policy_forward.1} parent=0 // pred_check_branch
    %13 = sbr.rel (0) target = $region9
  $region8: #{policy_forward.1} parent=0 // pred_region
    _
  $region9: #{policy_forward.1} parent=0 // pred_fallthru
    _
  // Predicated region
  $region10: #{policy_forward.1} parent=0 // pred_check
    _
  $region11: #{policy_forward.1} parent=0 // pred_check_branch
    %15 = sbr.rel (0) target = $region13
  $region12: #{policy_forward.1} parent=0 // pred_region
    _
  $region13: #{policy_forward.1} parent=0 // pred_fallthru
    _
  // Predicated region
  $region14: #{policy_forward.1} parent=0 // pred_check
    _
  $region15: #{policy_forward.1} parent=0 // pred_check_branch
    %17 = sbr.rel (0) target = $region17
  $region16: #{policy_forward.1} parent=0 // pred_region
    _
  $region17: #{policy_forward.1} parent=0 // pred_fallthru
    _
  // Predicated region
  $region18: #{policy_forward.1} parent=0 // pred_check
    _
  $region19: #{policy_forward.1} parent=0 // pred_check_branch
    %19 = sbr.rel (0) target = $region21
  $region20: #{policy_forward.1} parent=0 // pred_region
    _
  $region21: #{policy_forward.1} parent=0 // pred_fallthru
    _
  %v20 = vld [vmem:[%s0] sm:$0xf]
  %v21 = vld [vmem:[%s1] sm:$0xff]
  %v22 = vld [vmem:[%s1 + $0x8] sm:$0xff]
  %v23 = vld [vmem:[%s1 + $0x10] sm:$0xff]
  %v24 = vld [vmem:[%s1 + $0x18] sm:$0xff]
  %v25 = vld [vmem:[%s2] sm:$0xff]
  %v26 = vld [vmem:[%s2 + $0x8] sm:$0xff]
  %v27 = vld [vmem:[%s2 + $0x10] sm:$0xff]
  %v28 = vld [vmem:[%s2 + $0x18] sm:$0xff]
  %30 = vset.pattern.permute.xlu0 0
  %31 = vperm.xlu0 %30, %v21
  %v32 = vpop.permute.xlu0 %31
  %35 = vset.pattern.permute.xlu0 0
  %36 = vperm.xlu0 %35, %v22
  %v37 = vpop.permute.xlu0 %36
  %40 = vset.pattern.permute.xlu0 0
  %41 = vperm.xlu0 %40, %v23
  %v42 = vpop.permute.xlu0 %41
  %45 = vset.pattern.permute.xlu0 0
  %46 = vperm.xlu0 %45, %v24
  %v47 = vpop.permute.xlu0 %46
  %v49 = vlaneseq
  %v50 = vshrl.u32 %v49, 7
  %v51 = vsub.s32 0, %v50
  %v52 = vrot.slane %v20, %v51
  %v53 = vmul.f32 %v32, %v52
  %v54 = vmul.f32 %v37, %v52
  %v55 = vmul.f32 %v42, %v52
  %v56 = vmul.f32 %v47, %v52
  %58 = vset.pattern.permute.xlu0 0
  %59 = vperm.xlu0 %58, %v25
  %v60 = vpop.permute.xlu0 %59
  %63 = vset.pattern.permute.xlu0 0
  %64 = vperm.xlu0 %63, %v26
  %v65 = vpop.permute.xlu0 %64
  %68 = vset.pattern.permute.xlu0 0
  %69 = vperm.xlu0 %68, %v27
  %v70 = vpop.permute.xlu0 %69
  %73 = vset.pattern.permute.xlu0 0
  %74 = vperm.xlu0 %73, %v28
  %v75 = vpop.permute.xlu0 %74
  %v77 = vadd.f32 %v60, %v53
  %v78 = vadd.f32 %v65, %v54
  %v79 = vadd.f32 %v70, %v55
  %v80 = vadd.f32 %v75, %v56
  %81 = vset.pattern.permute.xlu0 1
  %82 = vperm.xlu0 %81, %v21
  %v83 = vpop.permute.xlu0 %82
  %85 = vset.pattern.permute.xlu0 1
  %86 = vperm.xlu0 %85, %v22
  %v87 = vpop.permute.xlu0 %86
  %89 = vset.pattern.permute.xlu0 1
  %90 = vperm.xlu0 %89, %v23
  %v91 = vpop.permute.xlu0 %90
  %93 = vset.pattern.permute.xlu0 1
  %94 = vperm.xlu0 %93, %v24
  %v95 = vpop.permute.xlu0 %94
  %v97 = vlaneseq
  %v98 = vshrl.u32 %v97, 7
  %v99 = vsub.s32 1, %v98
  %v100 = vrot.slane %v20, %v99
  %v101 = vmul.f32 %v83, %v100
  %v102 = vmul.f32 %v87, %v100
  %v103 = vmul.f32 %v91, %v100
  %v104 = vmul.f32 %v95, %v100
  %v105 = vadd.f32 %v77, %v101
  %v106 = vadd.f32 %v78, %v102
  %v107 = vadd.f32 %v79, %v103
  %v108 = vadd.f32 %v80, %v104
  %109 = vset.pattern.permute.xlu0 2
  %110 = vperm.xlu0 %109, %v21
  %v111 = vpop.permute.xlu0 %110
  %113 = vset.pattern.permute.xlu0 2
  %114 = vperm.xlu0 %113, %v22
  %v115 = vpop.permute.xlu0 %114
  %117 = vset.pattern.permute.xlu0 2
  %118 = vperm.xlu0 %117, %v23
  %v119 = vpop.permute.xlu0 %118
  %121 = vset.pattern.permute.xlu0 2
  %122 = vperm.xlu0 %121, %v24
  %v123 = vpop.permute.xlu0 %122
  %v125 = vlaneseq
  %v126 = vshrl.u32 %v125, 7
  %v127 = vsub.s32 2, %v126
  %v128 = vrot.slane %v20, %v127
  %v129 = vmul.f32 %v111, %v128
  %v130 = vmul.f32 %v115, %v128
  %v131 = vmul.f32 %v119, %v128
  %v132 = vmul.f32 %v123, %v128
  %v133 = vadd.f32 %v105, %v129
  %v134 = vadd.f32 %v106, %v130
  %v135 = vadd.f32 %v107, %v131
  %v136 = vadd.f32 %v108, %v132
  %137 = vset.pattern.permute.xlu0 3
  %138 = vperm.xlu0 %137, %v21
  %v139 = vpop.permute.xlu0 %138
  %141 = vset.pattern.permute.xlu0 3
  %142 = vperm.xlu0 %141, %v22
  %v143 = vpop.permute.xlu0 %142
  %145 = vset.pattern.permute.xlu0 3
  %146 = vperm.xlu0 %145, %v23
  %v147 = vpop.permute.xlu0 %146
  %149 = vset.pattern.permute.xlu0 3
  %150 = vperm.xlu0 %149, %v24
  %v151 = vpop.permute.xlu0 %150
  %v153 = vlaneseq
  %v154 = vshrl.u32 %v153, 7
  %v155 = vsub.s32 3, %v154
  %v156 = vrot.slane %v20, %v155
  %v157 = vmul.f32 %v139, %v156
  %v158 = vmul.f32 %v143, %v156
  %v159 = vmul.f32 %v147, %v156
  %v160 = vmul.f32 %v151, %v156
  %v161 = vadd.f32 %v133, %v157
  %v162 = vadd.f32 %v134, %v158
  %v163 = vadd.f32 %v135, %v159
  %v164 = vadd.f32 %v136, %v160
  %v165 = vmax.f32 %v161, 0.0
  %v166 = vmax.f32 %v162, 0.0
  %v167 = vmax.f32 %v163, 0.0
  %v168 = vmax.f32 %v164, 0.0
  %v169 = vld [vmem:[%s3] sm:$0x3]
  %v170 = vld [vmem:[%s4] sm:$0x3]
  %172 = vset.pattern.permute.xlu0 0
  %173 = vperm.xlu0 %172, %v170
  %v174 = vpop.permute.xlu0 %173
  %vm176 = vcmask 261120
  %v178 = vsel %vm176, %v169, 0
  %180 = vmatprep.subr.mxu0 0.0
  %181 = vmatpush1.msra.mxu0 0.0
  %182 = vmatprep.subr.mxu0 0.0
  %183 = vmatpush1.msra.mxu0 0.0
  %184 = vmatprep.subr.mxu0 0.0
  %185 = vmatpush1.msra.mxu0 0.0
  %186 = vmatprep.subr.mxu0 0.0
  %187 = vmatpush1.msra.mxu0 0.0
  %188 = vmatprep.subr.mxu0 0.0
  %189 = vmatpush1.msra.mxu0 0.0
  %190 = vmatprep.subr.mxu0 0.0
  %191 = vmatpush1.msra.mxu0 0.0
  %192 = vmatprep.subr.mxu0 0.0
  %193 = vmatpush1.msra.mxu0 0.0
  %194 = vmatprep.subr.mxu0 0.0
  %195 = vmatpush1.msra.mxu0 0.0
  %196 = vmatprep.subr.mxu0 0.0
  %197 = vmatpush1.msra.mxu0 0.0
  %198 = vmatprep.subr.mxu0 0.0
  %199 = vmatpush1.msra.mxu0 0.0
  %200 = vmatprep.subr.mxu0 0.0
  %201 = vmatpush1.msra.mxu0 0.0
  %202 = vmatprep.subr.mxu0 0.0
  %203 = vmatpush1.msra.mxu0 0.0
  %204 = vmatprep.subr.mxu0 0.0
  %205 = vmatpush1.msra.mxu0 %v168
  %206 = vmatprep.subr.mxu0 0.0
  %207 = vmatpush1.msra.mxu0 %v167
  %208 = vmatprep.subr.mxu0 0.0
  %209 = vmatpush1.msra.mxu0 %v166
  %210 = vmatprep.subr.mxu0 0.0
  %211 = vmatpush1.msra.mxu0 %v165
  %212 = vmatprep.subr.mxu0 0.0
  %213 = vmatpush2.msra.mxu0 0.0
  %214 = vmatprep.subr.mxu0 0.0
  %215 = vmatpush2.msra.mxu0 0.0
  %216 = vmatprep.subr.mxu0 0.0
  %217 = vmatpush2.msra.mxu0 0.0
  %218 = vmatprep.subr.mxu0 0.0
  %219 = vmatpush2.msra.mxu0 0.0
  %220 = vmatprep.subr.mxu0 0.0
  %221 = vmatpush2.msra.mxu0 0.0
  %222 = vmatprep.subr.mxu0 0.0
  %223 = vmatpush2.msra.mxu0 0.0
  %224 = vmatprep.subr.mxu0 0.0
  %225 = vmatpush2.msra.mxu0 0.0
  %226 = vmatprep.subr.mxu0 0.0
  %227 = vmatpush2.msra.mxu0 0.0
  %228 = vmatprep.subr.mxu0 0.0
  %229 = vmatpush2.msra.mxu0 0.0
  %230 = vmatprep.subr.mxu0 0.0
  %231 = vmatpush2.msra.mxu0 0.0
  %232 = vmatprep.subr.mxu0 0.0
  %233 = vmatpush2.msra.mxu0 0.0
  %234 = vmatprep.subr.mxu0 0.0
  %235 = vmatpush2.msra.mxu0 0.0
  %236 = vmatprep.subr.mxu0 0.0
  %237 = vmatpush2.msra.mxu0 0.0
  %238 = vmatprep.subr.mxu0 0.0
  %239 = vmatpush2.msra.mxu0 0.0
  %240 = vmatprep.subr.mxu0 0.0
  %241 = vmatpush2.msra.mxu0 0.0
  %242 = vmatprep.subr.mxu0 0.0
  %243 = vmatpush2.msra.mxu0 0.0
  %244 = vmatprep.mubr.f32.mxu0 0.0
  %245 = vmatmul.mubr.f32.gmra.mxu0 %v178
  %v246 = vpop.f32.mrf.mxu0
  %v247 = vadd.f32 %v174, %v246
  %v248 = vpop.f32.mrf.mxu0
  %249 = vdwg.mxu0
  %v251 = vrot.slane %v247, 1
  %v253 = vmax.f32 %v247, %v251
  %v254 = vsub.f32 %v247, %v253
  %v255 = vmul.f32 %v254, 1.442695
  %v256 = vpow.pop %v255
  %v258 = vrot.slane %v253, 7
  %v260 = vsub.f32 %v247, %v258
  %v261 = vmul.f32 %v260, 1.442695
  %v262 = vpow.pop %v261
  %v264 = vrot.slane %v262, 1
  %v266 = vadd.f32 %v256, %v264
  %v267 = vrcp.pop %v266
  %v268 = vmul.f32 %v256, %v267
  %v270 = vrot.slane %v267, 7
  %v272 = vmul.f32 %v262, %v270
  %vm273 = vcmask 1040384
  %v274 = vsel %vm273, %v268, %v272
  %275 = vst [vmem:[%s5] sm:$0x3] %v274
  // Predicated region
  $region22: #{policy_forward.1} parent=0 // pred_check
    _
  $region23: #{policy_forward.1} parent=0 // pred_check_branch
    %277 = sbr.rel (0) target = $region25
  $region24: #{policy_forward.1} parent=0 // pred_region
    _
  $region25: #{policy_forward.1} parent=0 // pred_fallthru
    _
  // Predicated region
  $region26: #{policy_forward.1} parent=0 // pred_check
    _
  $region27: #{policy_forward.1} parent=0 // pred_check_branch
    %279 = sbr.rel (0) target = $region29
  $region28: #{policy_forward.1} parent=0 // pred_region
    _
  $region29: #{policy_forward.1} parent=0 // pred_fallthru
    _

</llo_original>
